<compile_context>
chip_gen: v7x
topology: tpu7x:2x2x1
jax: 0.10.0
libtpu: 0.0.40
codegen_flags: <defaults>
</compile_context>

<pallas_src>
import functools
import math

import jax
import jax.numpy as jnp
from jax.experimental import pallas as pl
from jax.experimental.pallas import tpu as pltpu


def _round_up(v, m):
    return ((v + m - 1) // m) * m


def _chip_info():
    """Best-effort chip identification (performance-only; never required)."""
    kind = ""
    try:
        kind = jax.devices()[0].device_kind.lower()
    except Exception:  # pragma: no cover - defensive
        pass
    is_v7 = "v7" in kind
    is_v5e = ("v5e" in kind) or ("v5 lite" in kind) or ("v5litepod" in kind)
    num_cores = 2 if is_v7 else 1
    # Physical VMEM: 128 MiB on v5e/v6e, 64 MiB per TC on v7x -> keep headroom.
    vmem_cap = (56 << 20) if is_v7 else (100 << 20)
    return kind, num_cores, is_v5e, vmem_cap


def _tile_bases(compute_itemsize, is_v5e):
    """(base_m, base_n, base_k) tile targets by compute dtype / chip."""
    if compute_itemsize <= 2:
        # bf16 operands: 512x512 x tk=1024 tiles are ~6-7 MiB double-buffered,
        # comfortably inside every chip's scoped VMEM.
        return 512, 512, 1024
    # f32 fallback path: stay modest so v5e's 16 MiB scoped default also fits.
    if is_v5e:
        return 256, 512, 512
    return 512, 512, 512


# ---------------------------------------------------------------------------
# Kernels
# ---------------------------------------------------------------------------

def _linear_accum_kernel(x_ref, w_ref, b_ref, o_ref, acc_ref, *, compute_dtype):
    """General path: (i, j, k) grid, f32 VMEM accumulator, bias in K-epilogue."""
    k = pl.program_id(2)

    @pl.when(k == 0)
    def _():
        acc_ref[...] = jnp.zeros_like(acc_ref)

    acc_ref[...] += jax.lax.dot_general(
        x_ref[...].astype(compute_dtype),
        w_ref[...].astype(compute_dtype),
        dimension_numbers=(((1,), (0,)), ((), ())),
        preferred_element_type=jnp.float32,
    )

    @pl.when(k == pl.num_programs(2) - 1)
    def _():
        o_ref[...] = (acc_ref[...] + b_ref[...].astype(jnp.float32)).astype(o_ref.dtype)


def _linear_resident_kernel(x_ref, w_ref, b_ref, o_ref, *, compute_dtype):
    """Fast path: whole (Kp, Np) weight resident in VMEM, grid over M only."""
    acc = jax.lax.dot_general(
        x_ref[...].astype(compute_dtype),
        w_ref[...].astype(compute_dtype),
        dimension_numbers=(((1,), (0,)), ((), ())),
        preferred_element_type=jnp.float32,
    )
    o_ref[...] = (acc + b_ref[...].astype(jnp.float32)).astype(o_ref.dtype)


# ---------------------------------------------------------------------------
# Parameter preparation (hoisted out of the per-call forward path)
# ---------------------------------------------------------------------------

def prepare_simple_linear_params(weight, bias=None, *, compute_dtype=jnp.bfloat16,
                                 tn=None, tk=None):
    """One-time weight layout work: transpose to (K, N), zero-pad to tile
    multiples, cast to the MXU compute dtype. Returns a dict of prepared params
    + the N/K tiling plan so every forward call only touches x."""
    N, K = weight.shape
    _, _, is_v5e, _ = _chip_info()
    csize = jnp.dtype(compute_dtype).itemsize
    _, base_n, base_k = _tile_bases(csize, is_v5e)

    tn = min(base_n, _round_up(N, 128)) if tn is None else int(tn)
    tk = min(base_k, _round_up(K, 128)) if tk is None else int(tk)
    assert tn % 128 == 0 and tk % 128 == 0, "tn/tk must be multiples of 128"
    Np, Kp = _round_up(N, tn), _round_up(K, tk)

    w_kn = jnp.asarray(weight).T                      # (K, N), contraction-first
    if (Kp, Np) != (K, N):
        w_kn = jnp.pad(w_kn, ((0, Kp - K), (0, Np - N)))
    w_kn = w_kn.astype(compute_dtype)                 # persistent bf16 copy

    if bias is None:
        b = jnp.zeros((Np,), dtype=jnp.float32)
    else:
        b = jnp.asarray(bias).astype(jnp.float32)
        if Np != N:
            b = jnp.pad(b, (0, Np - N))
    bias2d = b.reshape(1, Np)

    # Small-weight fast path: single K block and the whole weight strip fits.
    resident = (Kp == tk) and (Np <= 2048) and (Kp * Np * csize <= (4 << 20))

    return dict(w_kn=w_kn, bias=bias2d, N=N, K=K, Np=Np, Kp=Kp, tn=tn, tk=tk,
                compute_dtype=compute_dtype, resident=resident)


# ---------------------------------------------------------------------------
# Forward
# ---------------------------------------------------------------------------

def simple_linear_forward(x, params, *, tm=None):
    """Pallas SimpleLinear.forward -> {'logits': x @ W.T + b} on prepared params."""
    compute_dtype = params["compute_dtype"]
    csize = jnp.dtype(compute_dtype).itemsize
    K, N = params["K"], params["N"]
    Kp, Np = params["Kp"], params["Np"]
    tn, tk = params["tn"], params["tk"]
    resident = params["resident"]
    w_kn, bias2d = params["w_kn"], params["bias"]
    out_dtype = x.dtype

    lead = x.shape[:-1]
    assert x.shape[-1] == K, "last dim of x must equal in_features"
    x2d = x.reshape(-1, K)
    M = x2d.shape[0]

    _, num_cores, is_v5e, vmem_cap = _chip_info()
    base_m, _, _ = _tile_bases(csize, is_v5e)
    sub = 16 if csize <= 2 else 8          # dense sublane packing for bf16 stores
    tm = min(base_m, _round_up(M, sub)) if tm is None else int(tm)
    Mp = _round_up(M, tm)

    # v7x: make sure a 'parallel' axis has >= 2 blocks so both TCs get work.
    if num_cores >= 2:
        if resident:
            while Mp // tm < num_cores and tm >= 2 * sub and (tm // 2) % 8 == 0:
                tm //= 2
        elif (Mp // tm) * (Np // tn) < num_cores:
            if tn >= 256 and (tn // 2) % 128 == 0:
                tn //= 2
            elif tm >= 2 * sub and (tm // 2) % 8 == 0:
                tm //= 2

    grid_m = Mp // tm
    grid_n = 1 if resident else Np // tn
    grid_k = 1 if resident else Kp // tk

    # Pad x only when needed (zero-pad along K is exact for the contraction);
    # cast to the compute dtype in the wrapper only when the pad is paid anyway
    # or the x tile is revisited across N (halves repeated HBM reads).
    need_pad = (Mp, Kp) != (M, K)
    cast_in_wrapper = (jnp.dtype(x2d.dtype).itemsize > csize) and (need_pad or grid_n > 1)
    x_p = x2d
    if need_pad:
        x_p = jnp.pad(x_p, ((0, Mp - M), (0, Kp - K)))
    if cast_in_wrapper:
        x_p = x_p.astype(compute_dtype)

    xb = jnp.dtype(x_p.dtype).itemsize
    ob = jnp.dtype(out_dtype).itemsize

    if resident:
        # Weight + bias DMA'd once (constant block index); grid streams x over M.
        vmem_need = (2 * tm * Kp * xb + 2 * Kp * Np * csize
                     + 2 * tm * Np * ob + 2 * Np * 4)
        kern = functools.partial(_linear_resident_kernel, compute_dtype=compute_dtype)
        out_p = pl.pallas_call(
            kern,
            out_shape=jax.ShapeDtypeStruct((Mp, Np), out_dtype),
            grid=(grid_m,),
            in_specs=[
                pl.BlockSpec((tm, Kp), lambda i: (i, 0)),   # x strip
                pl.BlockSpec((Kp, Np), lambda i: (0, 0)),   # whole weight, resident
                pl.BlockSpec((1, Np), lambda i: (0, 0)),    # bias, resident
            ],
            out_specs=pl.BlockSpec((tm, Np), lambda i: (i, 0)),
            compiler_params=pltpu.CompilerParams(
                dimension_semantics=("parallel",),
                vmem_limit_bytes=int(min(vmem_cap, max(32 << 20, 2 * vmem_need))),
            ),
            cost_estimate=pl.CostEstimate(
                flops=2 * Mp * Np * Kp,
                transcendentals=0,
                bytes_accessed=int(Mp * Kp * xb + Kp * Np * csize
                                   + Np * 4 + Mp * Np * ob),
            ),
        )(x_p, w_kn, bias2d)
    else:
        vmem_need = (2 * tm * tk * xb + 2 * tk * tn * csize
                     + 2 * tm * tn * ob + tm * tn * 4 + 2 * tn * 4)
        kern = functools.partial(_linear_accum_kernel, compute_dtype=compute_dtype)
        out_p = pl.pallas_call(
            kern,
            out_shape=jax.ShapeDtypeStruct((Mp, Np), out_dtype),
            grid=(grid_m, grid_n, grid_k),
            in_specs=[
                pl.BlockSpec((tm, tk), lambda i, j, k: (i, k)),   # x tile
                pl.BlockSpec((tk, tn), lambda i, j, k: (k, j)),   # (K, N) weight tile
                pl.BlockSpec((1, tn), lambda i, j, k: (0, j)),    # bias tile
            ],
            out_specs=pl.BlockSpec((tm, tn), lambda i, j, k: (i, j)),
            scratch_shapes=[pltpu.VMEM((tm, tn), jnp.float32)],
            compiler_params=pltpu.CompilerParams(
                dimension_semantics=("parallel", "parallel", "arbitrary"),
                vmem_limit_bytes=int(min(vmem_cap, max(32 << 20, 2 * vmem_need))),
            ),
            cost_estimate=pl.CostEstimate(
                flops=2 * Mp * Np * Kp,
                transcendentals=0,
                # include revisit factors: x re-read grid_n times, W grid_m times
                bytes_accessed=int(Mp * Kp * xb * grid_n + Kp * Np * csize * grid_m
                                   + Np * 4 * grid_m + Mp * Np * ob),
            ),
        )(x_p, w_kn, bias2d)

    logits = out_p if (Mp, Np) == (M, N) else out_p[:M, :N]
    return {"logits": logits.reshape(*lead, N)}


def simple_linear(x, weight, bias=None, *, compute_dtype=jnp.bfloat16,
                  tm=None, tn=None, tk=None):
    """One-shot convenience matching the module signature (prep + forward)."""
    params = prepare_simple_linear_params(weight, bias, compute_dtype=compute_dtype,
                                          tn=tn, tk=tk)
    return simple_linear_forward(x, params, tm=tm)


def init_simple_linear_params(key, in_features, out_features, dtype=jnp.float32):
    """SimpleLinear.reset_parameters(): kaiming_uniform_(nonlinearity='linear'),
    bias = 0."""
    bound = math.sqrt(3.0) / math.sqrt(in_features)   # gain=1 for 'linear'
    weight = jax.random.uniform(
        key, (out_features, in_features), dtype=dtype, minval=-bound, maxval=bound)
    bias = jnp.zeros((out_features,), dtype=dtype)
    return weight, bias


if __name__ == "__main__":
    key = jax.random.PRNGKey(0)
    k_x, k_w, k_b, k_x2, k_w2 = jax.random.split(key, 5)

    def bf16_ref(x, w, b):
        # Reference with the same bf16-rounded operands and f32 accumulation.
        xr = x.astype(jnp.bfloat16).astype(jnp.float32)
        wr = w.astype(jnp.bfloat16).astype(jnp.float32)
        return xr @ wr.T + b

    # 1) Module-sized demo: SimpleLinear(32, 64) on a batch of 8 (resident fast path).
    batch, in_features, out_features = 8, 32, 64
    x = jax.random.normal(k_x, (batch, in_features), dtype=jnp.float32)
    weight, bias = init_simple_linear_params(k_w, in_features, out_features)

    params = prepare_simple_linear_params(weight, bias)          # bf16 compute
    logits = jax.block_until_ready(simple_linear_forward(x, params)["logits"])
    assert logits.shape == (batch, out_features)
    assert logits.dtype == x.dtype
    assert jnp.allclose(logits, bf16_ref(x, weight, bias), atol=1e-4, rtol=1e-4)

    # 2) Uneven shapes, nonzero bias, forced small tiles -> multi-step K
    #    accumulation, padding and the bias-once epilogue are all exercised.
    M2, K2, N2 = 300, 200, 320
    x2 = jax.random.normal(k_x2, (M2, K2), dtype=jnp.float32)
    w2 = jax.random.normal(k_w2, (N2, K2), dtype=jnp.float32) * 0.05
    b2 = jax.random.normal(k_b, (N2,), dtype=jnp.float32)
    out2 = jax.block_until_ready(
        simple_linear(x2, w2, b2, tm=128, tn=128, tk=128)["logits"])
    assert out2.shape == (M2, N2)
    assert jnp.allclose(out2, bf16_ref(x2, w2, b2), atol=5e-4, rtol=5e-3)

    # 3) f32 compute path (module-default dtype) on the demo shapes; tolerance is
    #    loose because XLA/Mosaic default MXU precision for f32 may use bf16 passes.
    out3 = jax.block_until_ready(
        simple_linear(x, weight, bias, compute_dtype=jnp.float32)["logits"])
    assert jnp.allclose(out3, x @ weight.T + bias, atol=3e-2, rtol=3e-2)

    print("KERNEL_OK")
</pallas_src>

<mosaic_0001>
module attributes {stable_mosaic.version = 11 : i64} {
  func.func @_linear_resident_kernel(%arg0: i32, %arg1: memref<16x128xbf16, #tpu.memory_space<vmem>>, %arg2: memref<128x128xbf16, #tpu.memory_space<vmem>>, %arg3: memref<1x128xf32, #tpu.memory_space<vmem>>, %arg4: memref<16x128xf32, #tpu.memory_space<vmem>>) attributes {dimension_semantics = [#tpu.dimension_semantics<parallel>], iteration_bounds = array<i64: 1>, scalar_prefetch = 0 : i64, scratch_operands = 0 : i64, tpu.core_type = #tpu.core_type<tc>, window_params = [{transform_indices = @transform_0, window_bounds = array<i64: 16, 128>}, {pipeline_mode = #tpu.pipeline_mode<synchronous>, transform_indices = @transform_1, window_bounds = array<i64: 128, 128>}, {pipeline_mode = #tpu.pipeline_mode<synchronous>, transform_indices = @transform_2, window_bounds = array<i64: 1, 128>}, {transform_indices = @transform_3, window_bounds = array<i64: 16, 128>}]} {
    %c0 = arith.constant 0 : index
    %c0_0 = arith.constant 0 : index
    %0 = vector.load %arg1[%c0, %c0_0] : memref<16x128xbf16, #tpu.memory_space<vmem>>, vector<16x128xbf16>
    %c0_1 = arith.constant 0 : index
    %c0_2 = arith.constant 0 : index
    %1 = vector.load %arg2[%c0_1, %c0_2] : memref<128x128xbf16, #tpu.memory_space<vmem>>, vector<128x128xbf16>
    %cst = arith.constant dense<0.000000e+00> : vector<16x128xf32>
    %2 = tpu.matmul %0, %1, %cst {dimension_numbers = #tpu.dot_dimension_numbers<[1], [0], [0], [1], [0, 0, 1, 1], [], []>} : vector<16x128xbf16>, vector<128x128xbf16>, vector<16x128xf32> -> vector<16x128xf32>
    %c0_3 = arith.constant 0 : index
    %c0_4 = arith.constant 0 : index
    %3 = vector.load %arg3[%c0_3, %c0_4] : memref<1x128xf32, #tpu.memory_space<vmem>>, vector<1x128xf32>
    %4 = vector.broadcast %3 : vector<1x128xf32> to vector<16x128xf32>
    %5 = arith.addf %2, %4 : vector<16x128xf32>
    %c0_5 = arith.constant 0 : index
    %c0_6 = arith.constant 0 : index
    %6 = vector.load %arg4[%c0_5, %c0_6] : memref<16x128xf32, #tpu.memory_space<vmem>>, vector<16x128xf32>
    tpu.vector_store %arg4[%c0_5, %c0_6], %5 {strides = array<i32>} : memref<16x128xf32, #tpu.memory_space<vmem>>, vector<16x128xf32>,
    return
  }
  func.func @transform_0(%arg0: i32) -> (i32, i32) {
    %c0_i32 = arith.constant 0 : i32
    %c0_i32_0 = arith.constant 0 : i32
    return %arg0, %c0_i32 : i32, i32
  }
  func.func @transform_1(%arg0: i32) -> (i32, i32) {
    %c0_i32 = arith.constant 0 : i32
    %c0_i32_0 = arith.constant 0 : i32
    %c0_i32_1 = arith.constant 0 : i32
    return %c0_i32, %c0_i32_0 : i32, i32
  }
  func.func @transform_2(%arg0: i32) -> (i32, i32) {
    %c0_i32 = arith.constant 0 : i32
    %c0_i32_0 = arith.constant 0 : i32
    %c0_i32_1 = arith.constant 0 : i32
    return %c0_i32, %c0_i32_0 : i32, i32
  }
  func.func @transform_3(%arg0: i32) -> (i32, i32) {
    %c0_i32 = arith.constant 0 : i32
    %c0_i32_0 = arith.constant 0 : i32
    return %arg0, %c0_i32 : i32, i32
  }
}

</mosaic_0001>

<llo_original>
// kernel: tpu_custom_call.1
$region0: #{tpu_custom_call.1}
  #allocation0 [shape = 'u32[]', space=smem, size = 0x4, offset = 0x4, fixed_abs, tag = 'smem constant byte address 0x4 - core index']
  #allocation1 [shape = 'u32[144,128]{1,0:T(1,128)}', space=vmem, size = 0x12000, scoped, tag = 'internal scratch']
  %s0 = inlined_call_operand.hbm [shape: bf16[16,128], index: 0, kind: input, shape index: {}]
  %s1 = inlined_call_operand.hbm [shape: bf16[128,128], index: 1, kind: input, shape index: {}]
  %s2 = inlined_call_operand.vmem [shape: f32[1,128], index: 2, kind: input, shape index: {}]
  %s3 = inlined_call_operand.hbm [shape: f32[16,128], index: 3, kind: output, shape index: {}]
  %s4 = sld [smem:[#allocation0]]
  $region30: #{tpu_custom_call.1} parent=0
    _
  %s6 = ssub.s32 1, %s4
  %s7 = scalar_select 0, %s6, %s4
  $region1: #{tpu_custom_call.1} parent=0
    #allocation2 [shape = 'u8[4096]{0}', space=vmem, size = 0x1000, scoped, tag = 'input window, operand 0, single buffered']
    #allocation3 [shape = 's32[1]{0}', space=sflag, size = 0x4, scoped, tag = 'scoped memory for tpu_custom_call.1']
    #allocation4 [shape = 's32[1]{0}', space=sflag, size = 0x4, scoped, tag = 'scoped memory for tpu_custom_call.1']
    #allocation5 [shape = 'u8[32768]{0}', space=vmem, size = 0x8000, scoped, tag = 'input window, operand 1, single buffered']
    #allocation6 [shape = 's32[1]{0}', space=sflag, size = 0x4, scoped, tag = 'scoped memory for tpu_custom_call.1']
    #allocation7 [shape = 'u8[8192]{0}', space=vmem, size = 0x2000, scoped, tag = 'output window, operand 0, single buffered']
    %8 = vsyncpa [#allocation3], 0
    %9 = vsyncpa [#allocation6], 0
    %10 = vsyncpa [#allocation4], 0
    // Predicated region
    $region2: #{tpu_custom_call.1} parent=1 // pred_check
      _
    $region3: #{tpu_custom_call.1} parent=1 // pred_check_branch
      %12 = sbr.rel (0) target = $region5
    $region4: #{tpu_custom_call.1} parent=1 // pred_region
      %s14 = ssub.s32 128, 128
      %15 = vsyncadd [#allocation3], %s14
      %s16 = sshll.u32 [#allocation2], 4
      %s17 = int_to_ptr.vmem [resolvable:$true] %s16
      %22 = dma.hbm_to_vmem [thread:$0]  %s0, 128, %s17, [#allocation3], 64, 64, 4
    $region5: #{tpu_custom_call.1} parent=1 // pred_fallthru
      _
    // Predicated region
    $region6: #{tpu_custom_call.1} parent=1 // pred_check
      _
    $region7: #{tpu_custom_call.1} parent=1 // pred_check_branch
      %24 = sbr.rel (0) target = $region9
    $region8: #{tpu_custom_call.1} parent=1 // pred_region
      %s26 = ssub.s32 1024, 1024
      %27 = vsyncadd [#allocation6], %s26
      %s28 = sshll.u32 [#allocation5], 4
      %s29 = int_to_ptr.vmem [resolvable:$true] %s28
      %34 = dma.hbm_to_vmem [thread:$0]  %s1, 1024, %s29, [#allocation6], 64, 64, 4
    $region9: #{tpu_custom_call.1} parent=1 // pred_fallthru
      _
    // Predicated region
    $region10: #{tpu_custom_call.1} parent=1 // pred_check
      _
    $region11: #{tpu_custom_call.1} parent=1 // pred_check_branch
      %36 = sbr.rel (0) target = $region13
    $region12: #{tpu_custom_call.1} parent=1 // pred_region
      _
    $region13: #{tpu_custom_call.1} parent=1 // pred_fallthru
      _
    // Predicated region
    $region14: #{tpu_custom_call.1} parent=1 // pred_check
      _
    $region15: #{tpu_custom_call.1} parent=1 // pred_check_branch
      %38 = sbr.rel (0) target = $region17
    $region16: #{tpu_custom_call.1} parent=1 // pred_region
      %39 = dma.done [#allocation3], 128
    $region17: #{tpu_custom_call.1} parent=1 // pred_fallthru
      _
    // Predicated region
    $region18: #{tpu_custom_call.1} parent=1 // pred_check
      _
    $region19: #{tpu_custom_call.1} parent=1 // pred_check_branch
      %41 = sbr.rel (0) target = $region21
    $region20: #{tpu_custom_call.1} parent=1 // pred_region
      %42 = dma.done [#allocation6], 1024
    $region21: #{tpu_custom_call.1} parent=1 // pred_fallthru
      _
    %v44 = vld [vmem:[#allocation2] sm:$0xf]
    %v45 = vld [vmem:[#allocation2 + $0x4] sm:$0xf]
    %v46 = vld [vmem:[#allocation5] sm:$0xf]
    %v47 = vld [vmem:[#allocation5 + $0x4] sm:$0xf]
    %v48 = vld [vmem:[#allocation5 + $0x8] sm:$0xf]
    %v49 = vld [vmem:[#allocation5 + $0xc] sm:$0xf]
    %v50 = vld [vmem:[#allocation5 + $0x10] sm:$0xf]
    %v51 = vld [vmem:[#allocation5 + $0x14] sm:$0xf]
    %v52 = vld [vmem:[#allocation5 + $0x18] sm:$0xf]
    %v53 = vld [vmem:[#allocation5 + $0x1c] sm:$0xf]
    %v54 = vld [vmem:[#allocation5 + $0x20] sm:$0xf]
    %v55 = vld [vmem:[#allocation5 + $0x24] sm:$0xf]
    %v56 = vld [vmem:[#allocation5 + $0x28] sm:$0xf]
    %v57 = vld [vmem:[#allocation5 + $0x2c] sm:$0xf]
    %v58 = vld [vmem:[#allocation5 + $0x30] sm:$0xf]
    %v59 = vld [vmem:[#allocation5 + $0x34] sm:$0xf]
    %v60 = vld [vmem:[#allocation5 + $0x38] sm:$0xf]
    %v61 = vld [vmem:[#allocation5 + $0x3c] sm:$0xf]
    %v62 = vld [vmem:[%s2] sm:$0x1]
    %v64 = vlaneseq
    %v65 = vshrl.u32 %v64, 7
    %v66 = vsub.s32 0, %v65
    %v67 = vrot.slane %v62, %v66
    %v71 = vunpack.c.l.b16 %v44
    %v72 = vunpack.c.l.b16 %v45
    %v73 = vpack.c.b16 %v72, %v71
    %v91 = vunpack.c.l.b16 %v46
    %v92 = vunpack.c.l.b16 %v47
    %v93 = vunpack.c.l.b16 %v48
    %v94 = vunpack.c.l.b16 %v49
    %v95 = vunpack.c.l.b16 %v50
    %v96 = vunpack.c.l.b16 %v51
    %v97 = vunpack.c.l.b16 %v52
    %v98 = vunpack.c.l.b16 %v53
    %v99 = vunpack.c.l.b16 %v54
    %v100 = vunpack.c.l.b16 %v55
    %v101 = vunpack.c.l.b16 %v56
    %v102 = vunpack.c.l.b16 %v57
    %v103 = vunpack.c.l.b16 %v58
    %v104 = vunpack.c.l.b16 %v59
    %v105 = vunpack.c.l.b16 %v60
    %v106 = vunpack.c.l.b16 %v61
    %v107 = vpack.c.b16 %v92, %v91
    %v108 = vpack.c.b16 %v94, %v93
    %v109 = vpack.c.b16 %v96, %v95
    %v110 = vpack.c.b16 %v98, %v97
    %v111 = vpack.c.b16 %v100, %v99
    %v112 = vpack.c.b16 %v102, %v101
    %v113 = vpack.c.b16 %v104, %v103
    %v114 = vpack.c.b16 %v106, %v105
    %123 = vmatprep.subr.bf16.mxu0 0
    %124 = vmatpush1.bf16.msra.mxu0 %v107
    %125 = vmatprep.subr.bf16.mxu0 0
    %126 = vmatpush1.bf16.msra.mxu0 %v108
    %127 = vmatprep.subr.bf16.mxu0 0
    %128 = vmatpush1.bf16.msra.mxu0 %v109
    %129 = vmatprep.subr.bf16.mxu0 0
    %130 = vmatpush1.bf16.msra.mxu0 %v110
    %131 = vmatprep.subr.bf16.mxu0 0
    %132 = vmatpush1.bf16.msra.mxu0 %v111
    %133 = vmatprep.subr.bf16.mxu0 0
    %134 = vmatpush1.bf16.msra.mxu0 %v112
    %135 = vmatprep.subr.bf16.mxu0 0
    %136 = vmatpush1.bf16.msra.mxu0 %v113
    %137 = vmatprep.subr.bf16.mxu0 0
    %138 = vmatpush1.bf16.msra.mxu0 %v114
    %139 = vmatprep.subr.bf16.mxu0 0
    %140 = vmatpush1.bf16.msra.mxu0 0
    %141 = vmatprep.subr.bf16.mxu0 0
    %142 = vmatpush1.bf16.msra.mxu0 0
    %143 = vmatprep.subr.bf16.mxu0 0
    %144 = vmatpush1.bf16.msra.mxu0 0
    %145 = vmatprep.subr.bf16.mxu0 0
    %146 = vmatpush1.bf16.msra.mxu0 0
    %147 = vmatprep.subr.bf16.mxu0 0
    %148 = vmatpush1.bf16.msra.mxu0 0
    %149 = vmatprep.subr.bf16.mxu0 0
    %150 = vmatpush1.bf16.msra.mxu0 0
    %151 = vmatprep.subr.bf16.mxu0 0
    %152 = vmatpush1.bf16.msra.mxu0 0
    %153 = vmatprep.subr.bf16.mxu0 0
    %154 = vmatpush1.bf16.msra.mxu0 0
    %155 = vmatprep.mubr.bf16.mxu0 0
    %156 = vmatmul.mubr.bf16.gmra.mrb[0].mxu0 %v73
    %v157 = vpop.f32.mrb[0].mxu0
    %v158 = vadd.f32 %v67, %v157
    %v159 = vpop.f32.mrb[0].mxu0
    %v160 = vpop.f32.mrb[0].mxu0
    %v161 = vadd.f32 %v67, %v160
    %v162 = vpop.f32.mrb[0].mxu0
    %163 = vdwg.mxu0
    %164 = vst [vmem:[#allocation7] sm:$0xff] %v158
    %165 = vst [vmem:[#allocation7 + $0x8] sm:$0xff] %v161
    // Predicated region
    $region22: #{tpu_custom_call.1} parent=1 // pred_check
      _
    $region23: #{tpu_custom_call.1} parent=1 // pred_check_branch
      %167 = sbr.rel (0) target = $region25
    $region24: #{tpu_custom_call.1} parent=1 // pred_region
      %s169 = ssub.s32 256, 256
      %170 = vsyncadd [#allocation4], %s169
      %s171 = sshll.u32 [#allocation7], 4
      %s172 = int_to_ptr.vmem [resolvable:$true] %s171
      %177 = dma.vmem_to_hbm [thread:$0]  %s172, 256, %s3, [#allocation4], 128, 128, 8
    $region25: #{tpu_custom_call.1} parent=1 // pred_fallthru
      _
    // Predicated region
    $region26: #{tpu_custom_call.1} parent=1 // pred_check
      _
    $region27: #{tpu_custom_call.1} parent=1 // pred_check_branch
      %179 = sbr.rel (0) target = $region29
    $region28: #{tpu_custom_call.1} parent=1 // pred_region
      %180 = dma.done [#allocation4], 256
    $region29: #{tpu_custom_call.1} parent=1 // pred_fallthru
      _
    %181 = vsyncpa [#allocation3], 1
    %182 = vsyncpa [#allocation6], 1
    %183 = vsyncpa [#allocation4], 1

</llo_original>
